<compile_context>
chip_gen: v5e
topology: v5e:2x2
jax: 0.10.0
libtpu: 0.0.40
codegen_flags: <defaults>
</compile_context>

<pallas_src>
import math
import functools

import jax
import jax.numpy as jnp
from jax.experimental import pallas as pl
from jax.experimental.pallas import tpu as pltpu


_NEG_LARGE = -1e30  # finite "minus infinity" for the online logsumexp


def _round_up(a, b):
    return (a + b - 1) // b * b


def arc_margin_kernel(x_ref, w_ref, label_ref, out_ref, rowloss_ref,
                      m_sc, l_sc, t_sc,
                      *, cos_m, sin_m, th, mm, scale, ls_eps, easy_margin,
                      num_classes, c_padded):
    """One (B-tile, C-tile) grid step of the ArcFace head + CE loss."""
    j = pl.program_id(1)
    nc_steps = pl.num_programs(1)
    tb, tc = out_ref.shape

    @pl.when(j == 0)
    def _init():
        m_sc[...] = jnp.full_like(m_sc, _NEG_LARGE)
        l_sc[...] = jnp.zeros_like(l_sc)
        t_sc[...] = jnp.zeros_like(t_sc)

    label = label_ref[...]                                  # (TB, 1) int32

    # x / w are pre-normalized bf16 (wrapper).  Contract on the last dim of both
    # operands (no transposed weight copy); f32 accumulation on the MXU.
    cosine = jax.lax.dot_general(
        x_ref[...], w_ref[...], dimension_numbers=(((1,), (1,)), ((), ())),
        preferred_element_type=jnp.float32)                 # (TB, TC)

    # Global class ids of this C tile; mask reused for mixing + target accumulation.
    col_ids = jax.lax.broadcasted_iota(jnp.int32, (tb, tc), 1) + j * tc
    target_mask = col_ids == label                          # (TB, TC) bool

    if ls_eps == 0.0:
        # Fast path: the margin only affects the single target column per row, so all
        # margin math runs on (TB, 1) vectors; the (TB, TC) work is one select-reduce,
        # one mask-mul and one add on top of the scale multiply.
        tgt_cos = jnp.sum(jnp.where(target_mask, cosine, 0.0), axis=1, keepdims=True)
        has_tgt = jnp.sum(target_mask.astype(jnp.float32), axis=1, keepdims=True)
        sine_r = jnp.sqrt(jnp.maximum(1.0 - tgt_cos * tgt_cos, 0.0))
        phi_r = tgt_cos * cos_m - sine_r * sin_m
        if easy_margin:
            phi_r = jnp.where(tgt_cos > 0.0, phi_r, tgt_cos)
        else:
            phi_r = jnp.where(tgt_cos > th, phi_r, tgt_cos - mm)
        delta = has_tgt * (phi_r - tgt_cos) * scale          # (TB, 1)
        output = cosine * scale + target_mask.astype(jnp.float32) * delta
        t_contrib = has_tgt * (phi_r * scale)                # target logit (if in tile)
    else:
        # General (label-smoothing) path: full-tile phi, but with the cheaper mix
        # output = scale * (cosine + one_hot * (phi - cosine)).
        sine = jnp.sqrt(jnp.maximum(1.0 - cosine * cosine, 0.0))
        phi = cosine * cos_m - sine * sin_m
        if easy_margin:
            phi = jnp.where(cosine > 0.0, phi, cosine)
        else:
            phi = jnp.where(cosine > th, phi, cosine - mm)
        one_hot = ((1.0 - ls_eps) * target_mask.astype(jnp.float32)
                   + ls_eps / num_classes)
        output = (cosine + one_hot * (phi - cosine)) * scale
        t_contrib = jnp.sum(jnp.where(target_mask, output, 0.0),
                            axis=1, keepdims=True)

    out_ref[...] = output.astype(out_ref.dtype)

    # ---- online logsumexp over the class axis (flash-attention style) ----
    if c_padded:
        lse_in = jnp.where(col_ids < num_classes, output, _NEG_LARGE)
    else:
        lse_in = output
    m_prev = m_sc[...]
    m_new = jnp.maximum(m_prev, jnp.max(lse_in, axis=1, keepdims=True))
    l_sc[...] = (l_sc[...] * jnp.exp(m_prev - m_new)
                 + jnp.sum(jnp.exp(lse_in - m_new), axis=1, keepdims=True))
    m_sc[...] = m_new
    t_sc[...] = t_sc[...] + t_contrib

    @pl.when(j == nc_steps - 1)
    def _finalize():
        lse = m_sc[...] + jnp.log(l_sc[...])
        rowloss_ref[...] = (lse - t_sc[...]).astype(rowloss_ref.dtype)


def arc_margin_product(x, weight, label, *, scale=30.0, margin=0.5,
                       easy_margin=False, ls_eps=0.0,
                       block_b=256, block_c=1024):
    """Forward pass of ArcMarginProduct: returns (scaled logits f32, CE loss)."""
    x = jnp.asarray(x, jnp.float32)
    weight = jnp.asarray(weight, jnp.float32)
    label = jnp.asarray(label, jnp.int32).reshape(-1)

    b, d = x.shape
    c = weight.shape[0]

    # Pre-normalize once in the wrapper (F.normalize: v / max(||v||, eps)) and cast to
    # bf16 for the MXU -> halves the HBM weight stream re-read every batch tile.
    eps = 1e-12
    x_n = (x * jax.lax.rsqrt(
        jnp.maximum(jnp.sum(x * x, axis=1, keepdims=True), eps * eps))
           ).astype(jnp.bfloat16)
    w_n = (weight * jax.lax.rsqrt(
        jnp.maximum(jnp.sum(weight * weight, axis=1, keepdims=True), eps * eps))
           ).astype(jnp.bfloat16)

    gran = 16                                   # bf16 sublane packing granularity
    tb = min(_round_up(b, gran), block_b)       # batch tile
    if _round_up(b, tb) == tb and b > gran:
        # Single batch block: halve it so the "parallel" axis has >=2 blocks and can
        # shard across v7x's two TensorCores.
        tb = _round_up(-(-b // 2), gran)
    tc = min(_round_up(c, 128), block_c)        # class tile (lane-dense)
    bp = _round_up(b, tb)
    cp = _round_up(c, tc)

    if bp != b:
        x_n = jnp.pad(x_n, ((0, bp - b), (0, 0)))
        label = jnp.pad(label, (0, bp - b))
    if cp != c:
        w_n = jnp.pad(w_n, ((0, cp - c), (0, 0)))
    label2d = label.reshape(bp, 1)

    nb, nc = bp // tb, cp // tc

    kernel = functools.partial(
        arc_margin_kernel,
        cos_m=math.cos(margin), sin_m=math.sin(margin),
        th=math.cos(math.pi - margin), mm=math.sin(math.pi - margin) * margin,
        scale=scale, ls_eps=ls_eps, easy_margin=easy_margin,
        num_classes=c, c_padded=(cp != c))

    # Explicit VMEM budget: double-buffered in/out tiles + scratch + headroom for the
    # live (TB,TC) f32 temporaries.  Capped at 48 MiB (safe on v7x's 64 MiB VMEM).
    buf_bytes = 2 * (tb * d * 2          # x tile (bf16)
                     + tc * d * 2        # w tile (bf16)
                     + tb * 4            # label tile
                     + tb * tc * 4       # logits tile (f32)
                     + tb * 4)           # per-row loss tile
    scratch_bytes = 3 * tb * 4
    temp_bytes = 8 * tb * tc * 4
    vmem_limit = buf_bytes + scratch_bytes + temp_bytes + (4 << 20)
    vmem_limit = int(min(max(vmem_limit, 32 << 20), 48 << 20))

    logits_p, rowloss = pl.pallas_call(
        kernel,
        out_shape=(jax.ShapeDtypeStruct((bp, cp), jnp.float32),
                   jax.ShapeDtypeStruct((bp, 1), jnp.float32)),
        grid_spec=pltpu.PrefetchScalarGridSpec(
            num_scalar_prefetch=0,
            grid=(nb, nc),
            in_specs=[
                pl.BlockSpec((tb, d), lambda i, j: (i, 0)),   # normalized x tile
                pl.BlockSpec((tc, d), lambda i, j: (j, 0)),   # normalized weight tile
                pl.BlockSpec((tb, 1), lambda i, j: (i, 0)),   # labels
            ],
            out_specs=(
                pl.BlockSpec((tb, tc), lambda i, j: (i, j)),  # scaled logits tile
                pl.BlockSpec((tb, 1), lambda i, j: (i, 0)),   # per-row CE loss
            ),
            scratch_shapes=[pltpu.VMEM((tb, 1), jnp.float32),   # running max
                            pltpu.VMEM((tb, 1), jnp.float32),   # running exp-sum
                            pltpu.VMEM((tb, 1), jnp.float32)],  # target logit
        ),
        compiler_params=pltpu.CompilerParams(
            dimension_semantics=("parallel", "arbitrary"),
            vmem_limit_bytes=vmem_limit),
    )(x_n, w_n, label2d)

    logits = logits_p[:b, :c]
    loss = jnp.mean(rowloss[:b, 0])
    return logits, loss


def ref_arc_margin(x, weight, label, *, scale=30.0, margin=0.5,
                   easy_margin=False, ls_eps=0.0):
    """Pure-JAX reference mirroring the module semantics (bf16 MXU operands)."""
    eps = 1e-12
    x = x.astype(jnp.float32)
    w = weight.astype(jnp.float32)
    x_n = (x * jax.lax.rsqrt(
        jnp.maximum(jnp.sum(x * x, 1, keepdims=True), eps * eps))).astype(jnp.bfloat16)
    w_n = (w * jax.lax.rsqrt(
        jnp.maximum(jnp.sum(w * w, 1, keepdims=True), eps * eps))).astype(jnp.bfloat16)
    cosine = jax.lax.dot_general(
        x_n, w_n, dimension_numbers=(((1,), (1,)), ((), ())),
        preferred_element_type=jnp.float32)
    sine = jnp.sqrt(jnp.maximum(1.0 - cosine * cosine, 0.0))
    cos_m, sin_m = math.cos(margin), math.sin(margin)
    th = math.cos(math.pi - margin)
    mm = math.sin(math.pi - margin) * margin
    phi = cosine * cos_m - sine * sin_m
    phi = (jnp.where(cosine > 0.0, phi, cosine) if easy_margin
           else jnp.where(cosine > th, phi, cosine - mm))
    c = w.shape[0]
    one_hot = jax.nn.one_hot(label, c, dtype=jnp.float32)
    if ls_eps > 0.0:
        one_hot = (1.0 - ls_eps) * one_hot + ls_eps / c
    out = (one_hot * phi + (1.0 - one_hot) * cosine) * scale
    lse = jax.scipy.special.logsumexp(out, axis=1)
    tgt = jnp.take_along_axis(out, label[:, None].astype(jnp.int32), axis=1)[:, 0]
    return out, jnp.mean(lse - tgt)


def xavier_uniform(key, out_features, in_features):
    # nn.init.xavier_uniform_ on a (out, in) weight: U(-a, a), a = sqrt(6/(in+out))
    a = math.sqrt(6.0 / (in_features + out_features))
    return jax.random.uniform(key, (out_features, in_features),
                              jnp.float32, -a, a)


if __name__ == "__main__":
    key = jax.random.PRNGKey(0)

    # Test 1: ls_eps==0 fast path, C not a multiple of the 128-wide class tile
    # (exercises padded-class masking in the online logsumexp).
    B, D, C = 8, 64, 200
    k1, k2, k3, key = jax.random.split(key, 4)
    x = jax.random.normal(k1, (B, D), jnp.float32)
    w = xavier_uniform(k2, C, D)
    lbl = jax.random.randint(k3, (B,), 0, C, jnp.int32)

    logits, loss = arc_margin_product(x, w, lbl, scale=30.0, margin=0.5)
    jax.block_until_ready((logits, loss))
    r_logits, r_loss = ref_arc_margin(x, w, lbl, scale=30.0, margin=0.5)
    assert logits.shape == (B, C)
    assert jnp.allclose(logits, r_logits, atol=2e-2, rtol=2e-2), \
        float(jnp.max(jnp.abs(logits - r_logits)))
    assert jnp.allclose(loss, r_loss, atol=2e-2), float(jnp.abs(loss - r_loss))

    # Test 2: easy_margin + label smoothing (general path), batch padded up to row tile.
    B2, D2, C2 = 12, 32, 96
    k1, k2, k3, key = jax.random.split(key, 4)
    x2 = jax.random.normal(k1, (B2, D2), jnp.float32)
    w2 = xavier_uniform(k2, C2, D2)
    lbl2 = jax.random.randint(k3, (B2,), 0, C2, jnp.int32)

    logits2, loss2 = arc_margin_product(x2, w2, lbl2, easy_margin=True, ls_eps=0.1)
    jax.block_until_ready((logits2, loss2))
    r_logits2, r_loss2 = ref_arc_margin(x2, w2, lbl2, easy_margin=True, ls_eps=0.1)
    assert jnp.allclose(logits2, r_logits2, atol=2e-2, rtol=2e-2)
    assert jnp.allclose(loss2, r_loss2, atol=2e-2)

    print("KERNEL_OK")
</pallas_src>

<mosaic_0001>
module attributes {stable_mosaic.version = 11 : i64} {
  func.func @arc_margin_kernel(%arg0: i32, %arg1: i32, %arg2: memref<16x64xbf16, #tpu.memory_space<vmem>>, %arg3: memref<256x64xbf16, #tpu.memory_space<vmem>>, %arg4: memref<16x1xi32, #tpu.memory_space<vmem>>, %arg5: memref<16x256xf32, #tpu.memory_space<vmem>>, %arg6: memref<16x1xf32, #tpu.memory_space<vmem>>, %arg7: memref<16x1xf32, #tpu.memory_space<vmem>>, %arg8: memref<16x1xf32, #tpu.memory_space<vmem>>, %arg9: memref<16x1xf32, #tpu.memory_space<vmem>>) attributes {dimension_semantics = [#tpu.dimension_semantics<parallel>, #tpu.dimension_semantics<arbitrary>], iteration_bounds = array<i64: 1, 1>, scalar_prefetch = 0 : i64, scratch_operands = 3 : i64, tpu.core_type = #tpu.core_type<tc>, window_params = [{transform_indices = @transform_0, window_bounds = array<i64: 16, 64>}, {transform_indices = @transform_1, window_bounds = array<i64: 256, 64>}, {transform_indices = @transform_2, window_bounds = array<i64: 16, 1>}, {transform_indices = @transform_3, window_bounds = array<i64: 16, 256>}, {transform_indices = @transform_4, window_bounds = array<i64: 16, 1>}]} {
    %c0_i32 = arith.constant 0 : i32
    %0 = arith.cmpi eq, %arg1, %c0_i32 : i32
    %1 = arith.extui %0 : i1 to i32
    %c0_i32_0 = arith.constant 0 : i32
    %2 = arith.cmpi ne, %1, %c0_i32_0 : i32
    scf.if %2 {
      %cst_37 = arith.constant -1.000000e+30 : f32
      %78 = vector.broadcast %cst_37 : f32 to vector<16x1xf32>
      %c0_38 = arith.constant 0 : index
      %c0_39 = arith.constant 0 : index
      %79 = vector.load %arg7[%c0_38, %c0_39] : memref<16x1xf32, #tpu.memory_space<vmem>>, vector<16x1xf32>
      tpu.vector_store %arg7[%c0_38, %c0_39], %78 {strides = array<i32>} : memref<16x1xf32, #tpu.memory_space<vmem>>, vector<16x1xf32>,
      %cst_40 = arith.constant 0.000000e+00 : f32
      %80 = vector.broadcast %cst_40 : f32 to vector<16x1xf32>
      %c0_41 = arith.constant 0 : index
      %c0_42 = arith.constant 0 : index
      %81 = vector.load %arg8[%c0_41, %c0_42] : memref<16x1xf32, #tpu.memory_space<vmem>>, vector<16x1xf32>
      tpu.vector_store %arg8[%c0_41, %c0_42], %80 {strides = array<i32>} : memref<16x1xf32, #tpu.memory_space<vmem>>, vector<16x1xf32>,
      %cst_43 = arith.constant 0.000000e+00 : f32
      %82 = vector.broadcast %cst_43 : f32 to vector<16x1xf32>
      %c0_44 = arith.constant 0 : index
      %c0_45 = arith.constant 0 : index
      %83 = vector.load %arg9[%c0_44, %c0_45] : memref<16x1xf32, #tpu.memory_space<vmem>>, vector<16x1xf32>
      tpu.vector_store %arg9[%c0_44, %c0_45], %82 {strides = array<i32>} : memref<16x1xf32, #tpu.memory_space<vmem>>, vector<16x1xf32>,
    } else {
    }
    %c0 = arith.constant 0 : index
    %c0_1 = arith.constant 0 : index
    %3 = vector.load %arg4[%c0, %c0_1] : memref<16x1xi32, #tpu.memory_space<vmem>>, vector<16x1xi32>
    %c0_2 = arith.constant 0 : index
    %c0_3 = arith.constant 0 : index
    %4 = vector.load %arg2[%c0_2, %c0_3] : memref<16x64xbf16, #tpu.memory_space<vmem>>, vector<16x64xbf16>
    %c0_4 = arith.constant 0 : index
    %c0_5 = arith.constant 0 : index
    %5 = vector.load %arg3[%c0_4, %c0_5] : memref<256x64xbf16, #tpu.memory_space<vmem>>, vector<256x64xbf16>
    %cst = arith.constant dense<0.000000e+00> : vector<16x256xf32>
    %6 = tpu.matmul %4, %5, %cst {dimension_numbers = #tpu.dot_dimension_numbers<[1], [1], [0], [0], [0, 0, 1, 0], [], []>} : vector<16x64xbf16>, vector<256x64xbf16>, vector<16x256xf32> -> vector<16x256xf32>
    %7 = tpu.iota {dimensions = array<i32: 1>} : vector<16x256xi32>
    %c256_i32 = arith.constant 256 : i32
    %8 = arith.muli %arg1, %c256_i32 : i32
    %9 = vector.broadcast %8 : i32 to vector<16x256xi32>
    %10 = arith.addi %7, %9 : vector<16x256xi32>
    %11 = vector.broadcast %3 : vector<16x1xi32> to vector<16x256xi32>
    %12 = arith.cmpi eq, %10, %11 : vector<16x256xi32>
    %cst_6 = arith.constant 0.000000e+00 : f32
    %13 = vector.broadcast %cst_6 : f32 to vector<16x256xf32>
    %14 = arith.select %12, %6, %13 : vector<16x256xi1>, vector<16x256xf32>
    %cst_7 = arith.constant dense<0.000000e+00> : vector<16xf32>
    %15 = vector.multi_reduction <add>, %14, %cst_7 [1] : vector<16x256xf32> to vector<16xf32>
    %16 = vector.shape_cast %15 : vector<16xf32> to vector<16x1xf32>
    %17 = arith.extui %12 : vector<16x256xi1> to vector<16x256xi32>
    %18 = arith.sitofp %17 : vector<16x256xi32> to vector<16x256xf32>
    %cst_8 = arith.constant dense<0.000000e+00> : vector<16xf32>
    %19 = vector.multi_reduction <add>, %18, %cst_8 [1] : vector<16x256xf32> to vector<16xf32>
    %20 = vector.shape_cast %19 : vector<16xf32> to vector<16x1xf32>
    %21 = arith.mulf %16, %16 : vector<16x1xf32>
    %cst_9 = arith.constant 1.000000e+00 : f32
    %22 = vector.broadcast %cst_9 : f32 to vector<16x1xf32>
    %23 = arith.subf %22, %21 : vector<16x1xf32>
    %cst_10 = arith.constant 0.000000e+00 : f32
    %24 = vector.broadcast %cst_10 : f32 to vector<16x1xf32>
    %25 = arith.maximumf %23, %24 : vector<16x1xf32>
    %26 = math.sqrt %25 : vector<16x1xf32>
    %cst_11 = arith.constant 0.87758255 : f32
    %27 = vector.broadcast %cst_11 : f32 to vector<16x1xf32>
    %28 = arith.mulf %16, %27 : vector<16x1xf32>
    %cst_12 = arith.constant 0.47942555 : f32
    %29 = vector.broadcast %cst_12 : f32 to vector<16x1xf32>
    %30 = arith.mulf %26, %29 : vector<16x1xf32>
    %31 = arith.subf %28, %30 : vector<16x1xf32>
    %cst_13 = arith.constant -0.87758255 : f32
    %32 = vector.broadcast %cst_13 : f32 to vector<16x1xf32>
    %33 = arith.cmpf ogt, %16, %32 : vector<16x1xf32>
    %cst_14 = arith.constant 0.239712775 : f32
    %34 = vector.broadcast %cst_14 : f32 to vector<16x1xf32>
    %35 = arith.subf %16, %34 : vector<16x1xf32>
    %36 = arith.select %33, %31, %35 : vector<16x1xi1>, vector<16x1xf32>
    %37 = arith.subf %36, %16 : vector<16x1xf32>
    %38 = arith.mulf %20, %37 : vector<16x1xf32>
    %cst_15 = arith.constant 3.000000e+01 : f32
    %39 = vector.broadcast %cst_15 : f32 to vector<16x1xf32>
    %40 = arith.mulf %38, %39 : vector<16x1xf32>
    %cst_16 = arith.constant 3.000000e+01 : f32
    %41 = vector.broadcast %cst_16 : f32 to vector<16x256xf32>
    %42 = arith.mulf %6, %41 : vector<16x256xf32>
    %43 = arith.extui %12 : vector<16x256xi1> to vector<16x256xi32>
    %44 = arith.sitofp %43 : vector<16x256xi32> to vector<16x256xf32>
    %45 = vector.broadcast %40 : vector<16x1xf32> to vector<16x256xf32>
    %46 = arith.mulf %44, %45 : vector<16x256xf32>
    %47 = arith.addf %42, %46 : vector<16x256xf32>
    %cst_17 = arith.constant 3.000000e+01 : f32
    %48 = vector.broadcast %cst_17 : f32 to vector<16x1xf32>
    %49 = arith.mulf %36, %48 : vector<16x1xf32>
    %50 = arith.mulf %20, %49 : vector<16x1xf32>
    %c0_18 = arith.constant 0 : index
    %c0_19 = arith.constant 0 : index
    %51 = vector.load %arg5[%c0_18, %c0_19] : memref<16x256xf32, #tpu.memory_space<vmem>>, vector<16x256xf32>
    tpu.vector_store %arg5[%c0_18, %c0_19], %47 {strides = array<i32>} : memref<16x256xf32, #tpu.memory_space<vmem>>, vector<16x256xf32>,
    %c200_i32 = arith.constant 200 : i32
    %52 = vector.broadcast %c200_i32 : i32 to vector<16x256xi32>
    %53 = arith.cmpi slt, %10, %52 : vector<16x256xi32>
    %cst_20 = arith.constant -1.000000e+30 : f32
    %54 = vector.broadcast %cst_20 : f32 to vector<16x256xf32>
    %55 = arith.select %53, %47, %54 : vector<16x256xi1>, vector<16x256xf32>
    %c0_21 = arith.constant 0 : index
    %c0_22 = arith.constant 0 : index
    %56 = vector.load %arg7[%c0_21, %c0_22] : memref<16x1xf32, #tpu.memory_space<vmem>>, vector<16x1xf32>
    %cst_23 = arith.constant dense<0xFF800000> : vector<16xf32>
    %57 = vector.multi_reduction <maximumf>, %55, %cst_23 [1] : vector<16x256xf32> to vector<16xf32>
    %58 = vector.shape_cast %57 : vector<16xf32> to vector<16x1xf32>
    %59 = arith.maximumf %56, %58 : vector<16x1xf32>
    %c0_24 = arith.constant 0 : index
    %c0_25 = arith.constant 0 : index
    %60 = vector.load %arg8[%c0_24, %c0_25] : memref<16x1xf32, #tpu.memory_space<vmem>>, vector<16x1xf32>
    %61 = arith.subf %56, %59 : vector<16x1xf32>
    %62 = math.exp %61 : vector<16x1xf32>
    %63 = arith.mulf %60, %62 : vector<16x1xf32>
    %64 = vector.broadcast %59 : vector<16x1xf32> to vector<16x256xf32>
    %65 = arith.subf %55, %64 : vector<16x256xf32>
    %66 = math.exp %65 : vector<16x256xf32>
    %cst_26 = arith.constant dense<0.000000e+00> : vector<16xf32>
    %67 = vector.multi_reduction <add>, %66, %cst_26 [1] : vector<16x256xf32> to vector<16xf32>
    %68 = vector.shape_cast %67 : vector<16xf32> to vector<16x1xf32>
    %69 = arith.addf %63, %68 : vector<16x1xf32>
    %c0_27 = arith.constant 0 : index
    %c0_28 = arith.constant 0 : index
    %70 = vector.load %arg8[%c0_27, %c0_28] : memref<16x1xf32, #tpu.memory_space<vmem>>, vector<16x1xf32>
    tpu.vector_store %arg8[%c0_27, %c0_28], %69 {strides = array<i32>} : memref<16x1xf32, #tpu.memory_space<vmem>>, vector<16x1xf32>,
    %c0_29 = arith.constant 0 : index
    %c0_30 = arith.constant 0 : index
    %71 = vector.load %arg7[%c0_29, %c0_30] : memref<16x1xf32, #tpu.memory_space<vmem>>, vector<16x1xf32>
    tpu.vector_store %arg7[%c0_29, %c0_30], %59 {strides = array<i32>} : memref<16x1xf32, #tpu.memory_space<vmem>>, vector<16x1xf32>,
    %c0_31 = arith.constant 0 : index
    %c0_32 = arith.constant 0 : index
    %72 = vector.load %arg9[%c0_31, %c0_32] : memref<16x1xf32, #tpu.memory_space<vmem>>, vector<16x1xf32>
    %73 = arith.addf %72, %50 : vector<16x1xf32>
    %c0_33 = arith.constant 0 : index
    %c0_34 = arith.constant 0 : index
    %74 = vector.load %arg9[%c0_33, %c0_34] : memref<16x1xf32, #tpu.memory_space<vmem>>, vector<16x1xf32>
    tpu.vector_store %arg9[%c0_33, %c0_34], %73 {strides = array<i32>} : memref<16x1xf32, #tpu.memory_space<vmem>>, vector<16x1xf32>,
    %c0_i32_35 = arith.constant 0 : i32
    %75 = arith.cmpi eq, %arg1, %c0_i32_35 : i32
    %76 = arith.extui %75 : i1 to i32
    %c0_i32_36 = arith.constant 0 : i32
    %77 = arith.cmpi ne, %76, %c0_i32_36 : i32
    scf.if %77 {
      %c0_37 = arith.constant 0 : index
      %c0_38 = arith.constant 0 : index
      %78 = vector.load %arg7[%c0_37, %c0_38] : memref<16x1xf32, #tpu.memory_space<vmem>>, vector<16x1xf32>
      %c0_39 = arith.constant 0 : index
      %c0_40 = arith.constant 0 : index
      %79 = vector.load %arg8[%c0_39, %c0_40] : memref<16x1xf32, #tpu.memory_space<vmem>>, vector<16x1xf32>
      %80 = math.log %79 : vector<16x1xf32>
      %81 = arith.addf %78, %80 : vector<16x1xf32>
      %c0_41 = arith.constant 0 : index
      %c0_42 = arith.constant 0 : index
      %82 = vector.load %arg9[%c0_41, %c0_42] : memref<16x1xf32, #tpu.memory_space<vmem>>, vector<16x1xf32>
      %83 = arith.subf %81, %82 : vector<16x1xf32>
      %c0_43 = arith.constant 0 : index
      %c0_44 = arith.constant 0 : index
      %84 = vector.load %arg6[%c0_43, %c0_44] : memref<16x1xf32, #tpu.memory_space<vmem>>, vector<16x1xf32>
      tpu.vector_store %arg6[%c0_43, %c0_44], %83 {strides = array<i32>} : memref<16x1xf32, #tpu.memory_space<vmem>>, vector<16x1xf32>,
    } else {
    }
    return
  }
  func.func @transform_0(%arg0: i32, %arg1: i32) -> (i32, i32) {
    %c0_i32 = arith.constant 0 : i32
    %c0_i32_0 = arith.constant 0 : i32
    return %arg0, %c0_i32 : i32, i32
  }
  func.func @transform_1(%arg0: i32, %arg1: i32) -> (i32, i32) {
    %c0_i32 = arith.constant 0 : i32
    %c0_i32_0 = arith.constant 0 : i32
    return %arg1, %c0_i32 : i32, i32
  }
  func.func @transform_2(%arg0: i32, %arg1: i32) -> (i32, i32) {
    %c0_i32 = arith.constant 0 : i32
    %c0_i32_0 = arith.constant 0 : i32
    return %arg0, %c0_i32 : i32, i32
  }
  func.func @transform_3(%arg0: i32, %arg1: i32) -> (i32, i32) {
    %c0_i32 = arith.constant 0 : i32
    return %arg0, %arg1 : i32, i32
  }
  func.func @transform_4(%arg0: i32, %arg1: i32) -> (i32, i32) {
    %c0_i32 = arith.constant 0 : i32
    %c0_i32_0 = arith.constant 0 : i32
    return %arg0, %c0_i32 : i32, i32
  }
}

</mosaic_0001>

<llo_original>
// kernel: tpu_custom_call.1
$region0: #{tpu_custom_call.1}
  #allocation0 [shape = 'u32[]', space=smem, size = 0x4, offset = 0x4, fixed_abs, tag = 'smem constant byte address 0x4 - core index']
  #allocation1 [shape = 'u32[72,128]{1,0:T(1,128)}', space=vmem, size = 0x9000, scoped, tag = 'internal scratch']
  #allocation2 [shape = 'f32[16,1]{1,0:T(8,128)}', space=vmem, size = 0x2000, scoped, tag = 'scratch operand']
  #allocation3 [shape = 'f32[16,1]{1,0:T(8,128)}', space=vmem, size = 0x2000, scoped, tag = 'scratch operand']
  #allocation4 [shape = 'f32[16,1]{1,0:T(8,128)}', space=vmem, size = 0x2000, scoped, tag = 'scratch operand']
  %s0 = inlined_call_operand.vmem [shape: bf16[16,64], index: 0, kind: input, shape index: {}]
  %s1 = inlined_call_operand.vmem [shape: bf16[256,64], index: 1, kind: input, shape index: {}]
  %s2 = inlined_call_operand.vmem [shape: s32[16,1], index: 2, kind: input, shape index: {}]
  %s3 = inlined_call_operand.hbm [shape: f32[16,256], index: 3, kind: output, shape index: {0}]
  %s4 = inlined_call_operand.vmem [shape: f32[16,1], index: 4, kind: output, shape index: {1}]
  %5 = xla_tuple %s3, %s4
  %s6 = sld [smem:[#allocation0]]
  $region38: #{tpu_custom_call.1} parent=0
    _
  %s8 = ssub.s32 1, %s6
  %s9 = scalar_select 0, %s8, %s6
  $region1: #{tpu_custom_call.1} parent=0
    #allocation5 [shape = 'u8[16384]{0}', space=vmem, size = 0x4000, scoped, tag = 'output window, operand 0, single buffered']
    #allocation6 [shape = 's32[1]{0}', space=sflag, size = 0x4, scoped, tag = 'scoped memory for tpu_custom_call.1']
    %10 = vsyncpa [#allocation6], 0
    // Predicated region
    $region2: #{tpu_custom_call.1} parent=1 // pred_check
      _
    $region3: #{tpu_custom_call.1} parent=1 // pred_check_branch
      %12 = sbr.rel (0) target = $region5
    $region4: #{tpu_custom_call.1} parent=1 // pred_region
      _
    $region5: #{tpu_custom_call.1} parent=1 // pred_fallthru
      _
    // Predicated region
    $region6: #{tpu_custom_call.1} parent=1 // pred_check
      _
    $region7: #{tpu_custom_call.1} parent=1 // pred_check_branch
      %14 = sbr.rel (0) target = $region9
    $region8: #{tpu_custom_call.1} parent=1 // pred_region
      _
    $region9: #{tpu_custom_call.1} parent=1 // pred_fallthru
      _
    // Predicated region
    $region10: #{tpu_custom_call.1} parent=1 // pred_check
      _
    $region11: #{tpu_custom_call.1} parent=1 // pred_check_branch
      %16 = sbr.rel (0) target = $region13
    $region12: #{tpu_custom_call.1} parent=1 // pred_region
      _
    $region13: #{tpu_custom_call.1} parent=1 // pred_fallthru
      _
    %p17 = scmp.eq.s32.totalorder 0, 0
    // Predicated region
    $region14: #{tpu_custom_call.1} parent=1 // pred_check
      %p18 = pneg %p17
    $region15: #{tpu_custom_call.1} parent=1 // pred_check_branch
      %20 = sbr.rel (%p18) target = $region17
    $region16: #{tpu_custom_call.1} parent=1 // pred_region
      %vm21 = vcmask 7168
      %22 = vst.msk [vmem:[#allocation2] sm:$0xff] %vm21, -1e+30
      %23 = vst.msk [vmem:[#allocation2 + $0x8] sm:$0xff] %vm21, -1e+30
      %24 = vst.msk [vmem:[#allocation3] sm:$0xff] %vm21, 0.0
      %25 = vst.msk [vmem:[#allocation3 + $0x8] sm:$0xff] %vm21, 0.0
      %26 = vst.msk [vmem:[#allocation4] sm:$0xff] %vm21, 0.0
      %27 = vst.msk [vmem:[#allocation4 + $0x8] sm:$0xff] %vm21, 0.0
    $region17: #{tpu_custom_call.1} parent=1 // pred_fallthru
      _
    %v28 = vld [vmem:[%s2] sm:$0xff]
    %v29 = vld [vmem:[%s2 + $0x8] sm:$0xff]
    %v30 = vld [vmem:[%s0] sm:$0xf]
    %v31 = vld [vmem:[%s0 + $0x4] sm:$0xf]
    %v32 = vld [vmem:[%s1] sm:$0xf]
    %v33 = vld [vmem:[%s1 + $0x4] sm:$0xf]
    %v34 = vld [vmem:[%s1 + $0x8] sm:$0xf]
    %v35 = vld [vmem:[%s1 + $0xc] sm:$0xf]
    %v36 = vld [vmem:[%s1 + $0x10] sm:$0xf]
    %v37 = vld [vmem:[%s1 + $0x14] sm:$0xf]
    %v38 = vld [vmem:[%s1 + $0x18] sm:$0xf]
    %v39 = vld [vmem:[%s1 + $0x1c] sm:$0xf]
    %v40 = vld [vmem:[%s1 + $0x20] sm:$0xf]
    %v41 = vld [vmem:[%s1 + $0x24] sm:$0xf]
    %v42 = vld [vmem:[%s1 + $0x28] sm:$0xf]
    %v43 = vld [vmem:[%s1 + $0x2c] sm:$0xf]
    %v44 = vld [vmem:[%s1 + $0x30] sm:$0xf]
    %v45 = vld [vmem:[%s1 + $0x34] sm:$0xf]
    %v46 = vld [vmem:[%s1 + $0x38] sm:$0xf]
    %v47 = vld [vmem:[%s1 + $0x3c] sm:$0xf]
    %v48 = vld [vmem:[%s1 + $0x40] sm:$0xf]
    %v49 = vld [vmem:[%s1 + $0x44] sm:$0xf]
    %v50 = vld [vmem:[%s1 + $0x48] sm:$0xf]
    %v51 = vld [vmem:[%s1 + $0x4c] sm:$0xf]
    %v52 = vld [vmem:[%s1 + $0x50] sm:$0xf]
    %v53 = vld [vmem:[%s1 + $0x54] sm:$0xf]
    %v54 = vld [vmem:[%s1 + $0x58] sm:$0xf]
    %v55 = vld [vmem:[%s1 + $0x5c] sm:$0xf]
    %v56 = vld [vmem:[%s1 + $0x60] sm:$0xf]
    %v57 = vld [vmem:[%s1 + $0x64] sm:$0xf]
    %v58 = vld [vmem:[%s1 + $0x68] sm:$0xf]
    %v59 = vld [vmem:[%s1 + $0x6c] sm:$0xf]
    %v60 = vld [vmem:[%s1 + $0x70] sm:$0xf]
    %v61 = vld [vmem:[%s1 + $0x74] sm:$0xf]
    %v62 = vld [vmem:[%s1 + $0x78] sm:$0xf]
    %v63 = vld [vmem:[%s1 + $0x7c] sm:$0xf]
    %v66 = vunpack.c.l.b16 %v30
    %v67 = vunpack.c.l.b16 %v31
    %v68 = vpack.c.b16 %v67, %v66
    %v101 = vunpack.c.l.b16 %v32
    %v102 = vunpack.c.l.b16 %v33
    %v103 = vunpack.c.l.b16 %v34
    %v104 = vunpack.c.l.b16 %v35
    %v105 = vunpack.c.l.b16 %v36
    %v106 = vunpack.c.l.b16 %v37
    %v107 = vunpack.c.l.b16 %v38
    %v108 = vunpack.c.l.b16 %v39
    %v109 = vunpack.c.l.b16 %v40
    %v110 = vunpack.c.l.b16 %v41
    %v111 = vunpack.c.l.b16 %v42
    %v112 = vunpack.c.l.b16 %v43
    %v113 = vunpack.c.l.b16 %v44
    %v114 = vunpack.c.l.b16 %v45
    %v115 = vunpack.c.l.b16 %v46
    %v116 = vunpack.c.l.b16 %v47
    %v117 = vunpack.c.l.b16 %v48
    %v118 = vunpack.c.l.b16 %v49
    %v119 = vunpack.c.l.b16 %v50
    %v120 = vunpack.c.l.b16 %v51
    %v121 = vunpack.c.l.b16 %v52
    %v122 = vunpack.c.l.b16 %v53
    %v123 = vunpack.c.l.b16 %v54
    %v124 = vunpack.c.l.b16 %v55
    %v125 = vunpack.c.l.b16 %v56
    %v126 = vunpack.c.l.b16 %v57
    %v127 = vunpack.c.l.b16 %v58
    %v128 = vunpack.c.l.b16 %v59
    %v129 = vunpack.c.l.b16 %v60
    %v130 = vunpack.c.l.b16 %v61
    %v131 = vunpack.c.l.b16 %v62
    %v132 = vunpack.c.l.b16 %v63
    %v133 = vpack.c.b16 %v102, %v101
    %v134 = vpack.c.b16 %v104, %v103
    %v135 = vpack.c.b16 %v106, %v105
    %v136 = vpack.c.b16 %v108, %v107
    %v137 = vpack.c.b16 %v110, %v109
    %v138 = vpack.c.b16 %v112, %v111
    %v139 = vpack.c.b16 %v114, %v113
    %v140 = vpack.c.b16 %v116, %v115
    %v141 = vpack.c.b16 %v118, %v117
    %v142 = vpack.c.b16 %v120, %v119
    %v143 = vpack.c.b16 %v122, %v121
    %v144 = vpack.c.b16 %v124, %v123
    %v145 = vpack.c.b16 %v126, %v125
    %v146 = vpack.c.b16 %v128, %v127
    %v147 = vpack.c.b16 %v130, %v129
    %v148 = vpack.c.b16 %v132, %v131
    %vm149 = vcmask 523264
    %v151 = vsel %vm149, %v68, 0
    %v154 = vsel %vm149, %v133, 0
    %v157 = vsel %vm149, %v134, 0
    %v160 = vsel %vm149, %v135, 0
    %v163 = vsel %vm149, %v136, 0
    %v166 = vsel %vm149, %v137, 0
    %v169 = vsel %vm149, %v138, 0
    %v172 = vsel %vm149, %v139, 0
    %v175 = vsel %vm149, %v140, 0
    %v178 = vsel %vm149, %v141, 0
    %v181 = vsel %vm149, %v142, 0
    %v184 = vsel %vm149, %v143, 0
    %v187 = vsel %vm149, %v144, 0
    %v190 = vsel %vm149, %v145, 0
    %v193 = vsel %vm149, %v146, 0
    %v196 = vsel %vm149, %v147, 0
    %v199 = vsel %vm149, %v148, 0
    %201 = vmatpush.bf16.xpose.msra.mxu0 %v175
    %202 = vmatpush.bf16.xpose.msra.mxu0 %v172
    %203 = vmatpush.bf16.xpose.msra.mxu0 %v169
    %204 = vmatpush.bf16.xpose.msra.mxu0 %v166
    %205 = vmatpush.bf16.xpose.msra.mxu0 %v163
    %206 = vmatpush.bf16.xpose.msra.mxu0 %v160
    %207 = vmatpush.bf16.xpose.msra.mxu0 %v157
    %208 = vmatpush.bf16.xpose.msra.mxu0 %v154
    %209 = vmatmul.bf16.gmra.mxu0 %v151
    %v210 = vpop.f32.mrf.mxu0
    %v211 = vadd.f32 0.0, %v210
    %v212 = vpop.f32.mrf.mxu0
    %v213 = vadd.f32 0.0, %v212
    %214 = vdwg.mxu0
    %215 = vmatpush.bf16.xpose.msra.mxu0 %v199
    %216 = vmatpush.bf16.xpose.msra.mxu0 %v196
    %217 = vmatpush.bf16.xpose.msra.mxu0 %v193
    %218 = vmatpush.bf16.xpose.msra.mxu0 %v190
    %219 = vmatpush.bf16.xpose.msra.mxu0 %v187
    %220 = vmatpush.bf16.xpose.msra.mxu0 %v184
    %221 = vmatpush.bf16.xpose.msra.mxu0 %v181
    %222 = vmatpush.bf16.xpose.msra.mxu0 %v178
    %223 = vmatmul.bf16.gmra.mxu0 %v151
    %v224 = vpop.f32.mrf.mxu0
    %v225 = vadd.f32 0.0, %v224
    %v226 = vpop.f32.mrf.mxu0
    %v227 = vadd.f32 0.0, %v226
    %228 = vdwg.mxu0
    %v229 = vlaneseq
    %v230 = vand.u32 %v229, 127
    %v231 = vadd.s32 %v230, 128
    %s232 = smul.u32 0, 256
    %v233 = vstv %s232
    %v234 = vadd.s32 %v230, %v233
    %v235 = vadd.s32 %v231, %v233
    %236 = vset.pattern.permute.xlu0 0
    %237 = vperm.xlu0 %236, %v28
    %v238 = vpop.permute.xlu0 %237
    %239 = vset.pattern.permute.xlu0 0
    %240 = vperm.xlu0 %239, %v29
    %v241 = vpop.permute.xlu0 %240
    %vm242 = vcmp.eq.s32.totalorder %v234, %v238
    %vm243 = vcmp.eq.s32.totalorder %v235, %v238
    %vm244 = vcmp.eq.s32.totalorder %v234, %v241
    %vm245 = vcmp.eq.s32.totalorder %v235, %v241
    %v246 = vsel %vm242, %v211, 0.0
    %v247 = vsel %vm243, %v225, 0.0
    %v248 = vsel %vm244, %v213, 0.0
    %v249 = vsel %vm245, %v227, 0.0
    %v250 = vadd.f32 %v246, %v247
    %251 = vadd.xlane.f32.xlu0 %v250
    %v252 = vpop.xlane.xlu0 %251
    %v253 = vadd.f32 %v248, %v249
    %254 = vadd.xlane.f32.xlu0 %v253
    %v255 = vpop.xlane.xlu0 %254
    %v256 = vsel %vm242, 1, 0
    %v257 = vsel %vm243, 1, 0
    %v258 = vsel %vm244, 1, 0
    %v259 = vsel %vm245, 1, 0
    %v260 = vcvt.s32.f32 %v256
    %v261 = vcvt.s32.f32 %v257
    %v262 = vcvt.s32.f32 %v258
    %v263 = vcvt.s32.f32 %v259
    %v264 = vadd.f32 %v260, %v261
    %265 = vadd.xlane.f32.xlu0 %v264
    %v266 = vpop.xlane.xlu0 %265
    %v267 = vadd.f32 %v262, %v263
    %268 = vadd.xlane.f32.xlu0 %v267
    %v269 = vpop.xlane.xlu0 %268
    %v270 = vmul.f32 %v252, %v252
    %v271 = vmul.f32 %v255, %v255
    %v272 = vsub.f32 1.0, %v270
    %v273 = vsub.f32 1.0, %v271
    %v274 = vmax.f32 %v272, 0.0
    %v275 = vmax.f32 %v273, 0.0
    %v276 = vrsqrt.pop %v274
    %v277 = vmul.f32 %v276, %v274
    %v278 = vmul.f32 %v277, %v276
    %v279 = vmul.f32 0.5, %v278
    %v280 = vsub.f32 1.5, %v279
    %v281 = vmul.f32 %v276, %v280
    %v282 = vmul.f32 %v274, %v281
    %vm283 = vcmp.eq.f32.partialorder %v274, inf
    %v284 = vsel %vm283, %v274, %v282
    %vm285 = vcmp.eq.f32.partialorder %v274, 0.0
    %v286 = vand.u32 %v274, 2147483648
    %v287 = vsel %vm285, %v286, %v284
    %v288 = vrsqrt.pop %v275
    %v289 = vmul.f32 %v288, %v275
    %v290 = vmul.f32 %v289, %v288
    %v291 = vmul.f32 0.5, %v290
    %v292 = vsub.f32 1.5, %v291
    %v293 = vmul.f32 %v288, %v292
    %v294 = vmul.f32 %v275, %v293
    %vm295 = vcmp.eq.f32.partialorder %v275, inf
    %v296 = vsel %vm295, %v275, %v294
    %vm297 = vcmp.eq.f32.partialorder %v275, 0.0
    %v298 = vand.u32 %v275, 2147483648
    %v299 = vsel %vm297, %v298, %v296
    %v300 = vmul.f32 %v252, 0.87758255
    %v301 = vmul.f32 %v255, 0.87758255
    %v302 = vmul.f32 %v287, 0.47942555
    %v303 = vmul.f32 %v299, 0.47942555
    %v304 = vsub.f32 %v300, %v302
    %v305 = vsub.f32 %v301, %v303
    %vm306 = vcmp.gt.f32.partialorder %v252, -0.87758255
    %vm307 = vcmp.gt.f32.partialorder %v255, -0.87758255
    %v308 = vsub.f32 %v252, 0.23971277
    %v309 = vsub.f32 %v255, 0.23971277
    %v310 = vsel %vm306, %v304, %v308
    %v311 = vsel %vm307, %v305, %v309
    %v312 = vsub.f32 %v310, %v252
    %v313 = vsub.f32 %v311, %v255
    %v314 = vmul.f32 %v266, %v312
    %v315 = vmul.f32 %v269, %v313
    %v316 = vmul.f32 %v314, 30.0
    %v317 = vmul.f32 %v315, 30.0
    %v318 = vmul.f32 %v211, 30.0
    %v319 = vmul.f32 %v225, 30.0
    %v320 = vmul.f32 %v213, 30.0
    %v321 = vmul.f32 %v227, 30.0
    %v322 = vmul.f32 %v260, %v316
    %v323 = vmul.f32 %v261, %v316
    %v324 = vmul.f32 %v262, %v317
    %v325 = vmul.f32 %v263, %v317
    %v326 = vadd.f32 %v318, %v322
    %v327 = vadd.f32 %v319, %v323
    %v328 = vadd.f32 %v320, %v324
    %v329 = vadd.f32 %v321, %v325
    %v330 = vmul.f32 %v310, 30.0
    %v331 = vmul.f32 %v311, 30.0
    %v332 = vmul.f32 %v266, %v330
    %v333 = vmul.f32 %v269, %v331
    %334 = vst [vmem:[#allocation5] sm:$0xff] %v326
    %335 = vst [vmem:[#allocation5 + $0x8] sm:$0xff] %v327
    %336 = vst [vmem:[#allocation5 + $0x10] sm:$0xff] %v328
    %337 = vst [vmem:[#allocation5 + $0x18] sm:$0xff] %v329
    %vm338 = vcmp.lt.s32.totalorder %v234, 200
    %vm339 = vcmp.lt.s32.totalorder %v235, 200
    %v340 = vsel %vm338, %v326, -1e+30
    %v341 = vsel %vm339, %v327, -1e+30
    %v342 = vsel %vm338, %v328, -1e+30
    %v343 = vsel %vm339, %v329, -1e+30
    %v344 = vld [vmem:[#allocation2] sm:$0xff]
    %v345 = vld [vmem:[#allocation2 + $0x8] sm:$0xff]
    %v346 = vmax.f32 %v340, %v341
    %347 = vmax.xlane.f32.xlu0 %v346
    %v348 = vpop.xlane.xlu0 %347
    %v349 = vmax.f32 %v342, %v343
    %350 = vmax.xlane.f32.xlu0 %v349
    %v351 = vpop.xlane.xlu0 %350
    %v352 = vmax.f32 %v344, %v348
    %v353 = vmax.f32 %v345, %v351
    %v354 = vld [vmem:[#allocation3] sm:$0xff]
    %v355 = vld [vmem:[#allocation3 + $0x8] sm:$0xff]
    %v356 = vsub.f32 %v344, %v352
    %v357 = vsub.f32 %v345, %v353
    %v358 = vmul.f32 %v356, 1.442695
    %v359 = vpow.pop %v358
    %v360 = vmul.f32 %v357, 1.442695
    %v361 = vpow.pop %v360
    %v362 = vmul.f32 %v354, %v359
    %v363 = vmul.f32 %v355, %v361
    %365 = vset.pattern.permute.xlu0 0
    %366 = vperm.xlu0 %365, %v352
    %v367 = vpop.permute.xlu0 %366
    %370 = vset.pattern.permute.xlu0 0
    %371 = vperm.xlu0 %370, %v353
    %v372 = vpop.permute.xlu0 %371
    %v374 = vsub.f32 %v340, %v367
    %v375 = vsub.f32 %v341, %v367
    %v376 = vsub.f32 %v342, %v372
    %v377 = vsub.f32 %v343, %v372
    %v378 = vmul.f32 %v374, 1.442695
    %v379 = vpow.pop %v378
    %v380 = vmul.f32 %v375, 1.442695
    %v381 = vpow.pop %v380
    %v382 = vmul.f32 %v376, 1.442695
    %v383 = vpow.pop %v382
    %v384 = vmul.f32 %v377, 1.442695
    %v385 = vpow.pop %v384
    %v386 = vadd.f32 %v379, %v381
    %387 = vadd.xlane.f32.xlu0 %v386
    %v388 = vpop.xlane.xlu0 %387
    %v389 = vadd.f32 %v383, %v385
    %390 = vadd.xlane.f32.xlu0 %v389
    %v391 = vpop.xlane.xlu0 %390
    %v392 = vadd.f32 %v362, %v388
    %v393 = vadd.f32 %v363, %v391
    %vm394 = vcmask 7168
    %395 = vst.msk [vmem:[#allocation3] sm:$0xff] %vm394, %v392
    %396 = vst.msk [vmem:[#allocation3 + $0x8] sm:$0xff] %vm394, %v393
    %397 = vst.msk [vmem:[#allocation2] sm:$0xff] %vm394, %v352
    %398 = vst.msk [vmem:[#allocation2 + $0x8] sm:$0xff] %vm394, %v353
    %v399 = vld [vmem:[#allocation4] sm:$0xff]
    %v400 = vld [vmem:[#allocation4 + $0x8] sm:$0xff]
    %v401 = vadd.f32 %v399, %v332
    %v402 = vadd.f32 %v400, %v333
    %403 = vst.msk [vmem:[#allocation4] sm:$0xff] %vm394, %v401
    %404 = vst.msk [vmem:[#allocation4 + $0x8] sm:$0xff] %vm394, %v402
    // Predicated region
    $region18: #{tpu_custom_call.1} parent=1 // pred_check
      %p405 = pneg %p17
    $region19: #{tpu_custom_call.1} parent=1 // pred_check_branch
      %407 = sbr.rel (%p405) target = $region21
    $region20: #{tpu_custom_call.1} parent=1 // pred_region
      %v408 = vld [vmem:[#allocation2] sm:$0xff]
      %v409 = vld [vmem:[#allocation2 + $0x8] sm:$0xff]
      %v410 = vld [vmem:[#allocation3] sm:$0xff]
      %v411 = vld [vmem:[#allocation3 + $0x8] sm:$0xff]
      %v412 = vlog2.pop %v410
      %v413 = vmul.f32 %v412, 0.6931472
      %v414 = vlog2.pop %v411
      %v415 = vmul.f32 %v414, 0.6931472
      %v416 = vadd.f32 %v408, %v413
      %v417 = vadd.f32 %v409, %v415
      %v418 = vld [vmem:[#allocation4] sm:$0xff]
      %v419 = vld [vmem:[#allocation4 + $0x8] sm:$0xff]
      %v420 = vsub.f32 %v416, %v418
      %v421 = vsub.f32 %v417, %v419
      %422 = vst.msk [vmem:[%s4] sm:$0xff] %vm394, %v420
      %423 = vst.msk [vmem:[%s4 + $0x8] sm:$0xff] %vm394, %v421
    $region21: #{tpu_custom_call.1} parent=1 // pred_fallthru
      _
    // Predicated region
    $region22: #{tpu_custom_call.1} parent=1 // pred_check
      _
    $region23: #{tpu_custom_call.1} parent=1 // pred_check_branch
      %425 = sbr.rel (0) target = $region25
    $region24: #{tpu_custom_call.1} parent=1 // pred_region
      %427 = vsyncadd [#allocation6], 0
      %s428 = sshll.u32 [#allocation5], 4
      %s429 = int_to_ptr.vmem [resolvable:$true] %s428
      %s430 = sshll.u32 %s3, 4
      %s431 = int_to_ptr.hbm [resolvable:$true] %s430
      %436 = dma.vmem_to_hbm [thread:$0]  %s429, 512, %s431, [#allocation6], 256, 256, 16
    $region25: #{tpu_custom_call.1} parent=1 // pred_fallthru
      _
    // Predicated region
    $region26: #{tpu_custom_call.1} parent=1 // pred_check
      _
    $region27: #{tpu_custom_call.1} parent=1 // pred_check_branch
      %438 = sbr.rel (0) target = $region29
    $region28: #{tpu_custom_call.1} parent=1 // pred_region
      _
    $region29: #{tpu_custom_call.1} parent=1 // pred_fallthru
      _
    // Predicated region
    $region30: #{tpu_custom_call.1} parent=1 // pred_check
      _
    $region31: #{tpu_custom_call.1} parent=1 // pred_check_branch
      %440 = sbr.rel (0) target = $region33
    $region32: #{tpu_custom_call.1} parent=1 // pred_region
      %442 = dma.done [#allocation6], 512
    $region33: #{tpu_custom_call.1} parent=1 // pred_fallthru
      _
    // Predicated region
    $region34: #{tpu_custom_call.1} parent=1 // pred_check
      _
    $region35: #{tpu_custom_call.1} parent=1 // pred_check_branch
      %444 = sbr.rel (0) target = $region37
    $region36: #{tpu_custom_call.1} parent=1 // pred_region
      _
    $region37: #{tpu_custom_call.1} parent=1 // pred_fallthru
      _
    %445 = vsyncpa [#allocation6], 1

</llo_original>
